<compile_context>
chip_gen: v7x
topology: tpu7x:2x2x1
jax: 0.10.0
libtpu: 0.0.40
codegen_flags: <defaults>
</compile_context>

<pallas_src>
import functools

import jax
import jax.numpy as jnp
from jax.experimental import pallas as pl
from jax.experimental.pallas import tpu as pltpu


# ---------------------------------------------------------------------------
# Kernels
# ---------------------------------------------------------------------------
def _bn_stats_kernel(x_ref, sum_ref, sq_ref):
    """Accumulate per-lane sum and sum-of-squares over the batch-tile grid.

    x_ref: (tile_N, C*HW) block; sum_ref/sq_ref: resident (1, C*HW) f32 outputs.
    """
    @pl.when(pl.program_id(0) == 0)
    def _init():
        sum_ref[...] = jnp.zeros_like(sum_ref)
        sq_ref[...] = jnp.zeros_like(sq_ref)

    x = x_ref[...].astype(jnp.float32)                      # upcast per-tile
    sum_ref[...] += jnp.sum(x, axis=0, keepdims=True)
    sq_ref[...] += jnp.sum(x * x, axis=0, keepdims=True)


def _bn_relu_apply_kernel(x_ref, scale_ref, shift_ref, o_ref):
    """y = relu(x * scale + shift); everything lane-dense (tile_N, C*HW)."""
    x = x_ref[...].astype(jnp.float32)
    y = jnp.maximum(x * scale_ref[...] + shift_ref[...], 0.0)
    o_ref[...] = y.astype(o_ref.dtype)


def _bn_relu_pool_linear_kernel(x_ref, scale_ref, shift_ref, w_ref, b_ref, o_ref):
    """logits = relu(x*scale + shift) @ w_eff + b.

    The AvgPool2d(8) (global average over the 8x8 map) is folded into w_eff,
    so no normalized activation is materialized in HBM.
    x_ref: (tile_N, C*HW); scale/shift: (1, C*HW); w_ref: (C*HW, K_pad);
    b_ref: (1, K_pad); o_ref: (tile_N, K_pad).
    """
    x = x_ref[...].astype(jnp.float32)
    y = jnp.maximum(x * scale_ref[...] + shift_ref[...], 0.0)
    logits = jnp.dot(y, w_ref[...], preferred_element_type=jnp.float32) + b_ref[...]
    o_ref[...] = logits.astype(o_ref.dtype)


# ---------------------------------------------------------------------------
# Tiling helpers (generation-aware block budget)
# ---------------------------------------------------------------------------
def _block_budget_bytes():
    """Per-block VMEM budget: ~1/16 of physical VMEM, capped at 8 MiB.

    -> ~8 MiB on v5e/v6e (128 MiB VMEM), ~4 MiB on v7x (64 MiB VMEM), which
    keeps double-buffered input blocks + resident weight comfortably under the
    default scoped-VMEM limits on all three generations.
    """
    try:
        info = pltpu.get_tpu_info()
        vmem = getattr(info, "vmem_capacity_bytes", None)
        if vmem:
            return int(min(max(vmem // 16, 1 << 20), 8 << 20))
    except Exception:
        pass
    return 4 << 20


def _pick_batch_tile(n, row_bytes, budget_bytes):
    """Rows per block: full extent if it fits the budget, else the largest
    multiple of 8 that divides n and fits (keeps the (8,128) constraint)."""
    max_rows = max(1, budget_bytes // max(row_bytes, 1))
    if n <= max_rows:
        return n                                  # full extent is always legal
    t = (min(max_rows, n) // 8) * 8
    while t >= 8:
        if n % t == 0:
            return t
        t -= 8
    # TODO(synk): remainder-block handling for batch sizes not divisible by 8
    # at very large row widths; fall back to a single full-extent block.
    return n


# ---------------------------------------------------------------------------
# BN scale/shift (training-mode batch statistics)
# ---------------------------------------------------------------------------
def _bn_scale_shift(x2, gamma, beta, n, c, hw, tile_n, eps):
    """Pass 1: one lane-dense read of x -> per-channel scale/shift broadcast
    to (1, C*HW) lane vectors."""
    chw = c * hw
    grid = (n // tile_n,)

    lane_sum, lane_sq = pl.pallas_call(
        _bn_stats_kernel,
        out_shape=(jax.ShapeDtypeStruct((1, chw), jnp.float32),
                   jax.ShapeDtypeStruct((1, chw), jnp.float32)),
        grid=grid,
        in_specs=[pl.BlockSpec((tile_n, chw), lambda i: (i, 0))],
        out_specs=(pl.BlockSpec((1, chw), lambda i: (0, 0)),
                   pl.BlockSpec((1, chw), lambda i: (0, 0))),
        compiler_params=pltpu.CompilerParams(
            dimension_semantics=("arbitrary",)),   # sequential accumulation
    )(x2)

    # Tiny per-channel finalize (C*HW elements) in plain XLA: negligible work.
    # One-pass variance with f32 accumulation + clamp (PyTorch-equivalent for
    # roughly-centered inputs; a two-pass variant would cost another HBM read).
    inv_count = 1.0 / float(n * hw)
    ch_sum = jnp.sum(lane_sum.reshape(c, hw), axis=1)
    ch_sq = jnp.sum(lane_sq.reshape(c, hw), axis=1)
    mean = ch_sum * inv_count
    var = jnp.maximum(ch_sq * inv_count - mean * mean, 0.0)
    a = jax.lax.rsqrt(var + float(eps)) * gamma.astype(jnp.float32)
    scale_b = jnp.repeat(a, hw).reshape(1, chw)
    shift_b = jnp.repeat(beta.astype(jnp.float32) - mean * a, hw).reshape(1, chw)
    return scale_b, shift_b


# ---------------------------------------------------------------------------
# Public forwards
# ---------------------------------------------------------------------------
def bn_relu_forward(x_nchw, gamma, beta, *, eps=1e-5):
    """bn_relu_layer: BatchNorm2d (batch stats) + ReLU, returns (N, C, H, W)."""
    n, c, h, w = x_nchw.shape
    hw = h * w
    chw = c * hw
    x2 = x_nchw.reshape(n, chw)                  # free, contiguous view

    tile_n = _pick_batch_tile(n, chw * x_nchw.dtype.itemsize, _block_budget_bytes())
    grid = (n // tile_n,)
    scale_b, shift_b = _bn_scale_shift(x2, gamma, beta, n, c, hw, tile_n, eps)

    y2 = pl.pallas_call(
        _bn_relu_apply_kernel,
        out_shape=jax.ShapeDtypeStruct((n, chw), x_nchw.dtype),
        grid=grid,
        in_specs=[
            pl.BlockSpec((tile_n, chw), lambda i: (i, 0)),
            pl.BlockSpec((1, chw), lambda i: (0, 0)),
            pl.BlockSpec((1, chw), lambda i: (0, 0)),
        ],
        out_specs=pl.BlockSpec((tile_n, chw), lambda i: (i, 0)),
        compiler_params=pltpu.CompilerParams(
            dimension_semantics=("parallel",)),
    )(x2, scale_b, shift_b)
    return y2.reshape(n, c, h, w)


def output_layer_forward(x_nchw, gamma, beta, lin_w, lin_b, *, eps=1e-5):
    """output_layer: BN+ReLU -> AvgPool2d(8) -> flatten -> Dropout -> Linear.

    The pool/flatten/linear are fused into the BN apply pass; the normalized
    activation is never written to HBM (only the logits are).
    """
    n, c, h, w = x_nchw.shape
    hw = h * w
    chw = c * hw
    x2 = x_nchw.reshape(n, chw)                  # free, contiguous view

    tile_n = _pick_batch_tile(n, chw * x_nchw.dtype.itemsize, _block_budget_bytes())
    grid = (n // tile_n,)

    # Pass 1: per-channel scale/shift from batch statistics.
    scale_b, shift_b = _bn_scale_shift(x2, gamma, beta, n, c, hw, tile_n, eps)

    # Fold AvgPool2d(8) (== global average over the 8x8 map) into the Linear:
    # logits[n,k] = sum_{c,j} relu_y[n, c*HW+j] * W[k,c]/HW + b[k].
    k = lin_w.shape[0]
    k_pad = max(128, pl.cdiv(k, 128) * 128)      # lane-dense logits store
    w_eff = jnp.repeat(lin_w.T.astype(jnp.float32), hw, axis=0) * (1.0 / float(hw))
    w_eff = jnp.pad(w_eff, ((0, 0), (0, k_pad - k)))            # (C*HW, K_pad)
    b_eff = jnp.pad(lin_b.astype(jnp.float32), (0, k_pad - k)).reshape(1, k_pad)

    # nn.Dropout() is identity at inference time.
    # TODO(synk): training-mode dropout (p=0.5 mask via pltpu.prng_*) and
    # BatchNorm running-stat momentum updates are not replicated here.
    logits_pad = pl.pallas_call(
        _bn_relu_pool_linear_kernel,
        out_shape=jax.ShapeDtypeStruct((n, k_pad), jnp.float32),
        grid=grid,
        in_specs=[
            pl.BlockSpec((tile_n, chw), lambda i: (i, 0)),
            pl.BlockSpec((1, chw), lambda i: (0, 0)),
            pl.BlockSpec((1, chw), lambda i: (0, 0)),
            pl.BlockSpec((chw, k_pad), lambda i: (0, 0)),   # resident weight
            pl.BlockSpec((1, k_pad), lambda i: (0, 0)),
        ],
        out_specs=pl.BlockSpec((tile_n, k_pad), lambda i: (i, 0)),
        compiler_params=pltpu.CompilerParams(
            dimension_semantics=("parallel",)),   # batch tiles are independent
    )(x2, scale_b, shift_b, w_eff, b_eff)

    return logits_pad[:, :k]


# ---------------------------------------------------------------------------
# Pure-JAX reference
# ---------------------------------------------------------------------------
def _reference(x_nchw, gamma, beta, lin_w, lin_b, eps=1e-5):
    x = x_nchw.astype(jnp.float32)
    mean = jnp.mean(x, axis=(0, 2, 3), keepdims=True)
    var = jnp.mean((x - mean) ** 2, axis=(0, 2, 3), keepdims=True)
    y = (x - mean) * jax.lax.rsqrt(var + eps)
    y = y * gamma.reshape(1, -1, 1, 1) + beta.reshape(1, -1, 1, 1)
    y = jnp.maximum(y, 0.0)
    pooled = jnp.mean(y, axis=(2, 3))            # AvgPool2d(8) on 8x8 + flatten
    logits = pooled @ lin_w.T.astype(jnp.float32) + lin_b.astype(jnp.float32)
    return y, logits


if __name__ == "__main__":
    key = jax.random.PRNGKey(0)
    kx, kg, kb, kw, kbi = jax.random.split(key, 5)

    # output_layer implies an 8x8 spatial map (AvgPool2d(8) -> 1x1 -> Linear).
    N, C, H, W = 2, 4, 8, 8
    num_classes = 10

    x = jax.random.normal(kx, (N, C, H, W), dtype=jnp.float32)
    gamma = 1.0 + 0.1 * jax.random.normal(kg, (C,), dtype=jnp.float32)
    beta = 0.1 * jax.random.normal(kb, (C,), dtype=jnp.float32)
    lin_w = 0.1 * jax.random.normal(kw, (num_classes, C), dtype=jnp.float32)
    lin_b = 0.1 * jax.random.normal(kbi, (num_classes,), dtype=jnp.float32)

    y = bn_relu_forward(x, gamma, beta, eps=1e-5)
    logits = output_layer_forward(x, gamma, beta, lin_w, lin_b, eps=1e-5)
    y = jax.block_until_ready(y)
    logits = jax.block_until_ready(logits)

    y_ref, logits_ref = _reference(x, gamma, beta, lin_w, lin_b, eps=1e-5)
    assert y.shape == (N, C, H, W)
    assert logits.shape == (N, num_classes)
    assert jnp.allclose(y, y_ref, atol=1e-4, rtol=1e-4), "BN+ReLU mismatch vs reference"
    assert jnp.allclose(logits, logits_ref, atol=1e-4, rtol=1e-4), "logits mismatch vs reference"

    print("KERNEL_OK")
</pallas_src>

<mosaic_0001>
module attributes {stable_mosaic.version = 11 : i64} {
  func.func @_bn_stats_kernel(%arg0: i32, %arg1: memref<2x256xf32, #tpu.memory_space<vmem>>, %arg2: memref<1x256xf32, #tpu.memory_space<vmem>>, %arg3: memref<1x256xf32, #tpu.memory_space<vmem>>) attributes {dimension_semantics = [#tpu.dimension_semantics<arbitrary>], iteration_bounds = array<i64: 1>, scalar_prefetch = 0 : i64, scratch_operands = 0 : i64, tpu.core_type = #tpu.core_type<tc>, window_params = [{transform_indices = @transform_0, window_bounds = array<i64: 2, 256>}, {pipeline_mode = #tpu.pipeline_mode<synchronous>, transform_indices = @transform_1, window_bounds = array<i64: 1, 256>}, {pipeline_mode = #tpu.pipeline_mode<synchronous>, transform_indices = @transform_2, window_bounds = array<i64: 1, 256>}]} {
    %c0_i32 = arith.constant 0 : i32
    %0 = arith.cmpi eq, %arg0, %c0_i32 : i32
    %1 = arith.extui %0 : i1 to i32
    %c0_i32_0 = arith.constant 0 : i32
    %2 = arith.cmpi ne, %1, %c0_i32_0 : i32
    scf.if %2 {
      %cst_11 = arith.constant 0.000000e+00 : f32
      %15 = vector.broadcast %cst_11 : f32 to vector<1x256xf32>
      %c0_12 = arith.constant 0 : index
      %c0_13 = arith.constant 0 : index
      %16 = vector.load %arg2[%c0_12, %c0_13] : memref<1x256xf32, #tpu.memory_space<vmem>>, vector<1x256xf32>
      tpu.vector_store %arg2[%c0_12, %c0_13], %15 {strides = array<i32>} : memref<1x256xf32, #tpu.memory_space<vmem>>, vector<1x256xf32>,
      %cst_14 = arith.constant 0.000000e+00 : f32
      %17 = vector.broadcast %cst_14 : f32 to vector<1x256xf32>
      %c0_15 = arith.constant 0 : index
      %c0_16 = arith.constant 0 : index
      %18 = vector.load %arg3[%c0_15, %c0_16] : memref<1x256xf32, #tpu.memory_space<vmem>>, vector<1x256xf32>
      tpu.vector_store %arg3[%c0_15, %c0_16], %17 {strides = array<i32>} : memref<1x256xf32, #tpu.memory_space<vmem>>, vector<1x256xf32>,
    } else {
    }
    %c0 = arith.constant 0 : index
    %c0_1 = arith.constant 0 : index
    %3 = vector.load %arg1[%c0, %c0_1] : memref<2x256xf32, #tpu.memory_space<vmem>>, vector<2x256xf32>
    %c0_2 = arith.constant 0 : index
    %c0_3 = arith.constant 0 : index
    %4 = vector.load %arg2[%c0_2, %c0_3] : memref<1x256xf32, #tpu.memory_space<vmem>>, vector<1x256xf32>
    %cst = arith.constant dense<0.000000e+00> : vector<256xf32>
    %5 = vector.multi_reduction <add>, %3, %cst [0] : vector<2x256xf32> to vector<256xf32>
    %6 = vector.shape_cast %5 : vector<256xf32> to vector<1x256xf32>
    %7 = arith.addf %4, %6 : vector<1x256xf32>
    %c0_4 = arith.constant 0 : index
    %c0_5 = arith.constant 0 : index
    %8 = vector.load %arg2[%c0_4, %c0_5] : memref<1x256xf32, #tpu.memory_space<vmem>>, vector<1x256xf32>
    tpu.vector_store %arg2[%c0_4, %c0_5], %7 {strides = array<i32>} : memref<1x256xf32, #tpu.memory_space<vmem>>, vector<1x256xf32>,
    %c0_6 = arith.constant 0 : index
    %c0_7 = arith.constant 0 : index
    %9 = vector.load %arg3[%c0_6, %c0_7] : memref<1x256xf32, #tpu.memory_space<vmem>>, vector<1x256xf32>
    %10 = arith.mulf %3, %3 : vector<2x256xf32>
    %cst_8 = arith.constant dense<0.000000e+00> : vector<256xf32>
    %11 = vector.multi_reduction <add>, %10, %cst_8 [0] : vector<2x256xf32> to vector<256xf32>
    %12 = vector.shape_cast %11 : vector<256xf32> to vector<1x256xf32>
    %13 = arith.addf %9, %12 : vector<1x256xf32>
    %c0_9 = arith.constant 0 : index
    %c0_10 = arith.constant 0 : index
    %14 = vector.load %arg3[%c0_9, %c0_10] : memref<1x256xf32, #tpu.memory_space<vmem>>, vector<1x256xf32>
    tpu.vector_store %arg3[%c0_9, %c0_10], %13 {strides = array<i32>} : memref<1x256xf32, #tpu.memory_space<vmem>>, vector<1x256xf32>,
    return
  }
  func.func @transform_0(%arg0: i32) -> (i32, i32) {
    %c0_i32 = arith.constant 0 : i32
    %c0_i32_0 = arith.constant 0 : i32
    return %arg0, %c0_i32 : i32, i32
  }
  func.func @transform_1(%arg0: i32) -> (i32, i32) {
    %c0_i32 = arith.constant 0 : i32
    %c0_i32_0 = arith.constant 0 : i32
    %c0_i32_1 = arith.constant 0 : i32
    return %c0_i32, %c0_i32_0 : i32, i32
  }
  func.func @transform_2(%arg0: i32) -> (i32, i32) {
    %c0_i32 = arith.constant 0 : i32
    %c0_i32_0 = arith.constant 0 : i32
    %c0_i32_1 = arith.constant 0 : i32
    return %c0_i32, %c0_i32_0 : i32, i32
  }
}

</mosaic_0001>

<llo_original>
// kernel: tpu_custom_call.1
$region0: #{tpu_custom_call.1}
  #allocation0 [shape = 'u32[]', space=smem, size = 0x4, offset = 0x4, fixed_abs, tag = 'smem constant byte address 0x4 - core index']
  #allocation1 [shape = 'u32[144,128]{1,0:T(1,128)}', space=vmem, size = 0x12000, scoped, tag = 'internal scratch']
  %s0 = inlined_call_operand.hbm [shape: f32[2,256], index: 0, kind: input, shape index: {}]
  %s1 = inlined_call_operand.hbm [shape: f32[1,256], index: 1, kind: output, shape index: {0}]
  %s2 = inlined_call_operand.hbm [shape: f32[1,256], index: 2, kind: output, shape index: {1}]
  %3 = xla_tuple %s1, %s2
  %s4 = sld [smem:[#allocation0]]
  $region30: #{tpu_custom_call.1} parent=0
    _
  %s6 = ssub.s32 1, %s4
  %s7 = scalar_select 0, %s6, %s4
  $region1: #{tpu_custom_call.1} parent=0
    #allocation2 [shape = 'u8[2048]{0}', space=vmem, size = 0x800, scoped, tag = 'input window, operand 0, single buffered']
    #allocation3 [shape = 's32[1]{0}', space=sflag, size = 0x4, scoped, tag = 'scoped memory for tpu_custom_call.1']
    #allocation4 [shape = 's32[1]{0}', space=sflag, size = 0x4, scoped, tag = 'scoped memory for tpu_custom_call.1']
    #allocation5 [shape = 'u8[1024]{0}', space=vmem, size = 0x400, scoped, tag = 'output window, operand 0, single buffered']
    #allocation6 [shape = 'u8[1024]{0}', space=vmem, size = 0x400, scoped, tag = 'output window, operand 1, single buffered']
    #allocation7 [shape = 's32[1]{0}', space=sflag, size = 0x4, scoped, tag = 'scoped memory for tpu_custom_call.1']
    %8 = vsyncpa [#allocation3], 0
    %9 = vsyncpa [#allocation4], 0
    %10 = vsyncpa [#allocation7], 0
    // Predicated region
    $region2: #{tpu_custom_call.1} parent=1 // pred_check
      _
    $region3: #{tpu_custom_call.1} parent=1 // pred_check_branch
      %12 = sbr.rel (0) target = $region5
    $region4: #{tpu_custom_call.1} parent=1 // pred_region
      %s14 = ssub.s32 64, 64
      %15 = vsyncadd [#allocation3], %s14
      %s17 = sshll.u32 [#allocation2], 4
      %s18 = int_to_ptr.vmem [resolvable:$true] %s17
      %20 = dma.hbm_to_vmem [thread:$0]  %s0, 64, %s18, [#allocation3]
    $region5: #{tpu_custom_call.1} parent=1 // pred_fallthru
      _
    // Predicated region
    $region6: #{tpu_custom_call.1} parent=1 // pred_check
      _
    $region7: #{tpu_custom_call.1} parent=1 // pred_check_branch
      %22 = sbr.rel (0) target = $region9
    $region8: #{tpu_custom_call.1} parent=1 // pred_region
      %23 = dma.done [#allocation3], 64
    $region9: #{tpu_custom_call.1} parent=1 // pred_fallthru
      _
    %p24 = scmp.eq.s32.totalorder 0, 0
    // Predicated region
    $region10: #{tpu_custom_call.1} parent=1 // pred_check
      %p25 = pneg %p24
    $region11: #{tpu_custom_call.1} parent=1 // pred_check_branch
      %27 = sbr.rel (%p25) target = $region13
    $region12: #{tpu_custom_call.1} parent=1 // pred_region
      %v28 = vlaneseq
      %vm29 = vcmp.ge.s32.totalorder %v28, 0
      %vm30 = vcmp.lt.s32.totalorder %v28, 256
      %vm31 = vmand %vm29, %vm30
      %32 = vst.msk [vmem:[#allocation5] sm:$0x3] %vm31, 0.0
      %33 = vst.msk [vmem:[#allocation6] sm:$0x3] %vm31, 0.0
    $region13: #{tpu_custom_call.1} parent=1 // pred_fallthru
      _
    %v34 = vld [vmem:[#allocation2] sm:$0xf]
    %v35 = vld [vmem:[#allocation5] sm:$0x3]
    %v38 = vunpack.c.l.s4 1983009808
    %v39 = vunpack.c.0.s8 %v38
    %v40 = vlaneseq
    %v41 = vshrl.u32 %v40, 7
    %v42 = vsub.s32 %v39, %v41
    %v43 = vrot.slane %v34, %v42
    %v44 = vcombine.high %v43, %v43
    %vm47 = vcmask 1041408
    %v48 = vsel %vm47, %v43, 0.0
    %v49 = vrot.slane %v48, 4
    %v50 = vadd.f32 %v48, %v49
    %v51 = vrot.slane %v50, 2
    %v52 = vadd.f32 %v50, %v51
    %v53 = vrot.slane %v52, 1
    %v54 = vadd.f32 %v52, %v53
    %v55 = vsel %vm47, %v44, 0.0
    %v56 = vrot.slane %v55, 4
    %v57 = vadd.f32 %v55, %v56
    %v58 = vrot.slane %v57, 2
    %v59 = vadd.f32 %v57, %v58
    %v60 = vrot.slane %v59, 1
    %v61 = vadd.f32 %v59, %v60
    %v64 = vcombine.low %v54, %v61
    %v66 = vunpack.c.l.s4 1966171168
    %v67 = vunpack.c.0.s8 %v66
    %v68 = vlaneseq
    %v69 = vshrl.u32 %v68, 7
    %v70 = vsub.s32 %v67, %v69
    %v71 = vrot.slane %v64, %v70
    %v73 = vunpack.c.l.s4 1966171168
    %v74 = vunpack.c.0.s8 %v73
    %v75 = vlaneseq
    %v76 = vshrl.u32 %v75, 7
    %v77 = vsub.s32 %v74, %v76
    %v78 = vrot.slane %v71, %v77
    %v80 = vadd.f32 %v35, %v78
    %v81 = vlaneseq
    %vm82 = vcmp.ge.s32.totalorder %v81, 0
    %vm83 = vcmp.lt.s32.totalorder %v81, 256
    %vm84 = vmand %vm82, %vm83
    %85 = vst.msk [vmem:[#allocation5] sm:$0x3] %vm84, %v80
    %v86 = vld [vmem:[#allocation6] sm:$0x3]
    %v87 = vmul.f32 %v34, %v34
    %v90 = vunpack.c.l.s4 1983009808
    %v91 = vunpack.c.0.s8 %v90
    %v92 = vlaneseq
    %v93 = vshrl.u32 %v92, 7
    %v94 = vsub.s32 %v91, %v93
    %v95 = vrot.slane %v87, %v94
    %v96 = vcombine.high %v95, %v95
    %v99 = vsel %vm47, %v95, 0.0
    %v100 = vrot.slane %v99, 4
    %v101 = vadd.f32 %v99, %v100
    %v102 = vrot.slane %v101, 2
    %v103 = vadd.f32 %v101, %v102
    %v104 = vrot.slane %v103, 1
    %v105 = vadd.f32 %v103, %v104
    %v106 = vsel %vm47, %v96, 0.0
    %v107 = vrot.slane %v106, 4
    %v108 = vadd.f32 %v106, %v107
    %v109 = vrot.slane %v108, 2
    %v110 = vadd.f32 %v108, %v109
    %v111 = vrot.slane %v110, 1
    %v112 = vadd.f32 %v110, %v111
    %v115 = vcombine.low %v105, %v112
    %v117 = vunpack.c.l.s4 1966171168
    %v118 = vunpack.c.0.s8 %v117
    %v119 = vlaneseq
    %v120 = vshrl.u32 %v119, 7
    %v121 = vsub.s32 %v118, %v120
    %v122 = vrot.slane %v115, %v121
    %v124 = vunpack.c.l.s4 1966171168
    %v125 = vunpack.c.0.s8 %v124
    %v126 = vlaneseq
    %v127 = vshrl.u32 %v126, 7
    %v128 = vsub.s32 %v125, %v127
    %v129 = vrot.slane %v122, %v128
    %v131 = vadd.f32 %v86, %v129
    %132 = vst.msk [vmem:[#allocation6] sm:$0x3] %vm84, %v131
    // Predicated region
    $region14: #{tpu_custom_call.1} parent=1 // pred_check
      _
    $region15: #{tpu_custom_call.1} parent=1 // pred_check_branch
      %134 = sbr.rel (0) target = $region17
    $region16: #{tpu_custom_call.1} parent=1 // pred_region
      %s136 = ssub.s32 32, 32
      %137 = vsyncadd [#allocation4], %s136
      %s139 = sshll.u32 [#allocation5], 4
      %s140 = int_to_ptr.vmem [resolvable:$true] %s139
      %142 = dma.vmem_to_hbm [thread:$0]  %s140, 32, %s1, [#allocation4]
    $region17: #{tpu_custom_call.1} parent=1 // pred_fallthru
      _
    // Predicated region
    $region18: #{tpu_custom_call.1} parent=1 // pred_check
      _
    $region19: #{tpu_custom_call.1} parent=1 // pred_check_branch
      %144 = sbr.rel (0) target = $region21
    $region20: #{tpu_custom_call.1} parent=1 // pred_region
      %s146 = ssub.s32 32, 32
      %147 = vsyncadd [#allocation7], %s146
      %s149 = sshll.u32 [#allocation6], 4
      %s150 = int_to_ptr.vmem [resolvable:$true] %s149
      %152 = dma.vmem_to_hbm [thread:$0]  %s150, 32, %s2, [#allocation7]
    $region21: #{tpu_custom_call.1} parent=1 // pred_fallthru
      _
    // Predicated region
    $region22: #{tpu_custom_call.1} parent=1 // pred_check
      _
    $region23: #{tpu_custom_call.1} parent=1 // pred_check_branch
      %154 = sbr.rel (0) target = $region25
    $region24: #{tpu_custom_call.1} parent=1 // pred_region
      %155 = dma.done [#allocation4], 32
    $region25: #{tpu_custom_call.1} parent=1 // pred_fallthru
      _
    // Predicated region
    $region26: #{tpu_custom_call.1} parent=1 // pred_check
      _
    $region27: #{tpu_custom_call.1} parent=1 // pred_check_branch
      %157 = sbr.rel (0) target = $region29
    $region28: #{tpu_custom_call.1} parent=1 // pred_region
      %158 = dma.done [#allocation7], 32
    $region29: #{tpu_custom_call.1} parent=1 // pred_fallthru
      _
    %159 = vsyncpa [#allocation3], 1
    %160 = vsyncpa [#allocation4], 1
    %161 = vsyncpa [#allocation7], 1

</llo_original>
